<compile_context>
chip_gen: v6e
topology: v6e:2x2x1
jax: 0.10.0
libtpu: 0.0.40
codegen_flags: <defaults>
</compile_context>

<pallas_src>
import jax
import jax.numpy as jnp
from jax.experimental import pallas as pl
from jax.experimental.pallas import tpu as pltpu


def _round_up(a, m):
    return ((a + m - 1) // m) * m


def make_pos_embedding(max_logscale, N_freqs, logscale=True,
                       tile_cap=32768, vmem_budget_bytes=20 * 1024 * 1024):
    """Build a Pallas-backed PosEmbedding apply function.

    Frequencies are a deterministic buffer (not learned), computed exactly as
    in the PyTorch __init__ and baked into the kernel as static constants.
    """
    if logscale:
        freqs_arr = 2.0 ** jnp.linspace(0.0, float(max_logscale), N_freqs)
    else:
        freqs_arr = jnp.linspace(1.0, 2.0 ** float(max_logscale), N_freqs)
    freqs = tuple(float(f) for f in freqs_arr)  # static scalar constants

    d_in = 3
    d_out = 6 * N_freqs + 3
    d_pad = _round_up(d_out, 8)          # sublane-aligned compute height

    # ---------------- in-kernel shared compute (channel-major) -------------
    def _channel_major_pieces(x_f32):
        # x_f32: (3, t) with batch on the lane axis.  One stacked sin and one
        # stacked cos over a dense (3*N_freqs, t) block (full EUP vregs).
        xf = jnp.concatenate([f * x_f32 for f in freqs], axis=0)   # (3N, t)
        s = jnp.sin(xf)
        c = jnp.cos(xf)
        pieces = [x_f32]
        for i in range(N_freqs):
            pieces.append(s[3 * i:3 * i + 3])
            pieces.append(c[3 * i:3 * i + 3])
        return pieces                     # reference order: x, sin f0, cos f0, ...

    # ---------------- primary kernel: row-major (t, d_out) output ----------
    def kernel_rowmajor(xt_ref, o_ref):
        x = xt_ref[...].astype(jnp.float32)                        # (3, t)
        pieces = _channel_major_pieces(x)
        if d_pad != d_out:               # pad channels 27 -> 32 for an aligned flip
            pieces.append(jnp.zeros((d_pad - d_out, x.shape[1]), jnp.float32))
        res = jnp.concatenate(pieces, axis=0)                      # (d_pad, t)
        res_t = jnp.transpose(res, (1, 0))                         # (t, d_pad) — XLU
        o_ref[...] = res_t[:, :d_out].astype(o_ref.dtype)          # one dense store

    # ---------------- fallback kernel: channel-major (d_out, t) output -----
    def kernel_chmajor(xt_ref, o_ref):
        x = xt_ref[...].astype(jnp.float32)                        # (3, t)
        o_ref[...] = jnp.concatenate(_channel_major_pieces(x),
                                     axis=0).astype(o_ref.dtype)   # (d_out, t)

    # ---------------- tile selection ---------------------------------------
    def _auto_tile(B):
        # f32 words resident per batch row: double-buffered I/O blocks + temps.
        words = 2 * d_in + 2 * d_out + 3 + 9 * N_freqs + 2 * d_pad
        t = vmem_budget_bytes // (4 * words)
        t = min(t, tile_cap)
        # keep >= ~8 grid steps on large batches so both v7x cores stay busy
        t = min(t, _round_up(max(1, -(-B // 8)), 128))
        return int(max(128, (t // 128) * 128))

    # ---------------- host-side wrapper -------------------------------------
    def apply(x):
        B, D = x.shape
        assert D == d_in, f"expected x of shape (B, 3), got {x.shape}"
        dtype = x.dtype

        t = _auto_tile(B)
        grid = (pl.cdiv(B, t),)          # partial final block handled by Pallas

        # Channel-major view of the input so batch lands on the lane axis
        # (single small XLA relayout; no pad pass, nothing on the output side).
        xt = x.T                                                    # (3, B)

        itemsize = jnp.dtype(dtype).itemsize
        cost = pl.CostEstimate(
            flops=3 * N_freqs * B,                 # the f*x multiplies
            transcendentals=6 * N_freqs * B,       # sin + cos
            bytes_accessed=B * (d_in + d_out) * itemsize,
        )
        cparams = pltpu.CompilerParams(
            dimension_semantics=("parallel",),
            vmem_limit_bytes=32 * 1024 * 1024,
        )

        try:
            # Preferred: row-major output straight from the kernel.
            return pl.pallas_call(
                kernel_rowmajor,
                out_shape=jax.ShapeDtypeStruct((B, d_out), dtype),
                grid=grid,
                in_specs=[pl.BlockSpec((d_in, t), lambda i: (0, i))],
                out_specs=pl.BlockSpec((t, d_out), lambda i: (i, 0)),
                compiler_params=cparams,
                cost_estimate=cost,
            )(xt)
        except Exception:
            # TODO(synk): drop this fallback once the in-kernel 2-D transpose
            # is guaranteed on all toolchains; it re-adds one XLA transpose
            # pass on the output but is known-good.
            out_t = pl.pallas_call(
                kernel_chmajor,
                out_shape=jax.ShapeDtypeStruct((d_out, B), dtype),
                grid=grid,
                in_specs=[pl.BlockSpec((d_in, t), lambda i: (0, i))],
                out_specs=pl.BlockSpec((d_out, t), lambda i: (0, i)),
                compiler_params=cparams,
                cost_estimate=cost,
            )(xt)
            return out_t.T

    return apply, freqs_arr


def pos_embedding_ref(x, freqs):
    """Pure-JAX reference mirroring the PyTorch forward."""
    out = [x]
    for f in freqs:
        out.append(jnp.sin(f * x))
        out.append(jnp.cos(f * x))
    return jnp.concatenate(out, axis=-1)


if __name__ == "__main__":
    max_logscale = 3
    N_freqs = 4               # -> output dim = 6*4 + 3 = 27

    apply_fn, freqs = make_pos_embedding(max_logscale, N_freqs, logscale=True)

    key = jax.random.PRNGKey(0)
    ok = True
    # Small batch + a ragged batch (exercises partial blocks, no padding).
    for B in (16, 300):
        key, k = jax.random.split(key)
        x = jax.random.normal(k, (B, 3), dtype=jnp.float32)
        out = apply_fn(x)
        jax.block_until_ready(out)
        ref = pos_embedding_ref(x, freqs)
        assert out.shape == (B, 6 * N_freqs + 3), out.shape
        ok &= bool(jnp.allclose(out, ref, atol=1e-5, rtol=1e-5))

    assert ok, "mismatch vs reference"
    print("KERNEL_OK")
</pallas_src>

<mosaic_0001>
module attributes {stable_mosaic.version = 11 : i64} {
  func.func @kernel_rowmajor(%arg0: i32, %arg1: memref<3x128xf32, #tpu.memory_space<vmem>>, %arg2: memref<128x27xf32, #tpu.memory_space<vmem>>) attributes {dimension_semantics = [#tpu.dimension_semantics<parallel>], iteration_bounds = array<i64: 1>, scalar_prefetch = 0 : i64, scratch_operands = 0 : i64, tpu.core_type = #tpu.core_type<tc>, window_params = [{transform_indices = @transform_0, window_bounds = array<i64: 3, 128>}, {transform_indices = @transform_1, window_bounds = array<i64: 128, 27>}]} {
    %c0 = arith.constant 0 : index
    %c0_0 = arith.constant 0 : index
    %0 = vector.load %arg1[%c0, %c0_0] : memref<3x128xf32, #tpu.memory_space<vmem>>, vector<3x128xf32>
    %cst = arith.constant 1.000000e+00 : f32
    %1 = vector.broadcast %cst : f32 to vector<3x128xf32>
    %2 = arith.mulf %1, %0 : vector<3x128xf32>
    %cst_1 = arith.constant 2.000000e+00 : f32
    %3 = vector.broadcast %cst_1 : f32 to vector<3x128xf32>
    %4 = arith.mulf %3, %0 : vector<3x128xf32>
    %cst_2 = arith.constant 4.000000e+00 : f32
    %5 = vector.broadcast %cst_2 : f32 to vector<3x128xf32>
    %6 = arith.mulf %5, %0 : vector<3x128xf32>
    %cst_3 = arith.constant 8.000000e+00 : f32
    %7 = vector.broadcast %cst_3 : f32 to vector<3x128xf32>
    %8 = arith.mulf %7, %0 : vector<3x128xf32>
    %9 = tpu.concatenate %2, %4, %6, %8 in 0 : vector<3x128xf32>, vector<3x128xf32>, vector<3x128xf32>, vector<3x128xf32> -> vector<12x128xf32>
    %10 = math.sin %9 : vector<12x128xf32>
    %11 = math.cos %9 : vector<12x128xf32>
    %12 = vector.extract_strided_slice %10 {offsets = [0, 0], sizes = [3, 128], strides = [1, 1]} : vector<12x128xf32> to vector<3x128xf32>
    %13 = vector.extract_strided_slice %11 {offsets = [0, 0], sizes = [3, 128], strides = [1, 1]} : vector<12x128xf32> to vector<3x128xf32>
    %14 = vector.extract_strided_slice %10 {offsets = [3, 0], sizes = [3, 128], strides = [1, 1]} : vector<12x128xf32> to vector<3x128xf32>
    %15 = vector.extract_strided_slice %11 {offsets = [3, 0], sizes = [3, 128], strides = [1, 1]} : vector<12x128xf32> to vector<3x128xf32>
    %16 = vector.extract_strided_slice %10 {offsets = [6, 0], sizes = [3, 128], strides = [1, 1]} : vector<12x128xf32> to vector<3x128xf32>
    %17 = vector.extract_strided_slice %11 {offsets = [6, 0], sizes = [3, 128], strides = [1, 1]} : vector<12x128xf32> to vector<3x128xf32>
    %18 = vector.extract_strided_slice %10 {offsets = [9, 0], sizes = [3, 128], strides = [1, 1]} : vector<12x128xf32> to vector<3x128xf32>
    %19 = vector.extract_strided_slice %11 {offsets = [9, 0], sizes = [3, 128], strides = [1, 1]} : vector<12x128xf32> to vector<3x128xf32>
    %cst_4 = arith.constant 0.000000e+00 : f32
    %20 = vector.broadcast %cst_4 : f32 to vector<5x128xf32>
    %21 = tpu.concatenate %0, %12, %13, %14, %15, %16, %17, %18, %19, %20 in 0 : vector<3x128xf32>, vector<3x128xf32>, vector<3x128xf32>, vector<3x128xf32>, vector<3x128xf32>, vector<3x128xf32>, vector<3x128xf32>, vector<3x128xf32>, vector<3x128xf32>, vector<5x128xf32> -> vector<32x128xf32>
    %22 = tpu.transpose %21, [1, 0] : vector<32x128xf32> -> vector<128x32xf32>
    %23 = vector.extract_strided_slice %22 {offsets = [0, 0], sizes = [128, 27], strides = [1, 1]} : vector<128x32xf32> to vector<128x27xf32>
    %c0_5 = arith.constant 0 : index
    %c0_6 = arith.constant 0 : index
    %24 = vector.load %arg2[%c0_5, %c0_6] : memref<128x27xf32, #tpu.memory_space<vmem>>, vector<128x27xf32>
    tpu.vector_store %arg2[%c0_5, %c0_6], %23 {strides = array<i32>} : memref<128x27xf32, #tpu.memory_space<vmem>>, vector<128x27xf32>,
    return
  }
  func.func @transform_0(%arg0: i32) -> (i32, i32) {
    %c0_i32 = arith.constant 0 : i32
    %c0_i32_0 = arith.constant 0 : i32
    return %c0_i32, %arg0 : i32, i32
  }
  func.func @transform_1(%arg0: i32) -> (i32, i32) {
    %c0_i32 = arith.constant 0 : i32
    %c0_i32_0 = arith.constant 0 : i32
    return %arg0, %c0_i32 : i32, i32
  }
}

module attributes {stable_mosaic.version = 11 : i64} {
  func.func @kernel_chmajor(%arg0: i32, %arg1: memref<3x128xf32, #tpu.memory_space<vmem>>, %arg2: memref<27x128xf32, #tpu.memory_space<vmem>>) attributes {dimension_semantics = [#tpu.dimension_semantics<parallel>], iteration_bounds = array<i64: 1>, scalar_prefetch = 0 : i64, scratch_operands = 0 : i64, tpu.core_type = #tpu.core_type<tc>, window_params = [{transform_indices = @transform_0, window_bounds = array<i64: 3, 128>}, {transform_indices = @transform_1, window_bounds = array<i64: 27, 128>}]} {
    %c0 = arith.constant 0 : index
    %c0_0 = arith.constant 0 : index
    %0 = vector.load %arg1[%c0, %c0_0] : memref<3x128xf32, #tpu.memory_space<vmem>>, vector<3x128xf32>
    %cst = arith.constant 1.000000e+00 : f32
    %1 = vector.broadcast %cst : f32 to vector<3x128xf32>
    %2 = arith.mulf %1, %0 : vector<3x128xf32>
    %cst_1 = arith.constant 2.000000e+00 : f32
    %3 = vector.broadcast %cst_1 : f32 to vector<3x128xf32>
    %4 = arith.mulf %3, %0 : vector<3x128xf32>
    %cst_2 = arith.constant 4.000000e+00 : f32
    %5 = vector.broadcast %cst_2 : f32 to vector<3x128xf32>
    %6 = arith.mulf %5, %0 : vector<3x128xf32>
    %cst_3 = arith.constant 8.000000e+00 : f32
    %7 = vector.broadcast %cst_3 : f32 to vector<3x128xf32>
    %8 = arith.mulf %7, %0 : vector<3x128xf32>
    %9 = tpu.concatenate %2, %4, %6, %8 in 0 : vector<3x128xf32>, vector<3x128xf32>, vector<3x128xf32>, vector<3x128xf32> -> vector<12x128xf32>
    %10 = math.sin %9 : vector<12x128xf32>
    %11 = math.cos %9 : vector<12x128xf32>
    %12 = vector.extract_strided_slice %10 {offsets = [0, 0], sizes = [3, 128], strides = [1, 1]} : vector<12x128xf32> to vector<3x128xf32>
    %13 = vector.extract_strided_slice %11 {offsets = [0, 0], sizes = [3, 128], strides = [1, 1]} : vector<12x128xf32> to vector<3x128xf32>
    %14 = vector.extract_strided_slice %10 {offsets = [3, 0], sizes = [3, 128], strides = [1, 1]} : vector<12x128xf32> to vector<3x128xf32>
    %15 = vector.extract_strided_slice %11 {offsets = [3, 0], sizes = [3, 128], strides = [1, 1]} : vector<12x128xf32> to vector<3x128xf32>
    %16 = vector.extract_strided_slice %10 {offsets = [6, 0], sizes = [3, 128], strides = [1, 1]} : vector<12x128xf32> to vector<3x128xf32>
    %17 = vector.extract_strided_slice %11 {offsets = [6, 0], sizes = [3, 128], strides = [1, 1]} : vector<12x128xf32> to vector<3x128xf32>
    %18 = vector.extract_strided_slice %10 {offsets = [9, 0], sizes = [3, 128], strides = [1, 1]} : vector<12x128xf32> to vector<3x128xf32>
    %19 = vector.extract_strided_slice %11 {offsets = [9, 0], sizes = [3, 128], strides = [1, 1]} : vector<12x128xf32> to vector<3x128xf32>
    %20 = tpu.concatenate %0, %12, %13, %14, %15, %16, %17, %18, %19 in 0 : vector<3x128xf32>, vector<3x128xf32>, vector<3x128xf32>, vector<3x128xf32>, vector<3x128xf32>, vector<3x128xf32>, vector<3x128xf32>, vector<3x128xf32>, vector<3x128xf32> -> vector<27x128xf32>
    %c0_4 = arith.constant 0 : index
    %c0_5 = arith.constant 0 : index
    %21 = vector.load %arg2[%c0_4, %c0_5] : memref<27x128xf32, #tpu.memory_space<vmem>>, vector<27x128xf32>
    tpu.vector_store %arg2[%c0_4, %c0_5], %20 {strides = array<i32>} : memref<27x128xf32, #tpu.memory_space<vmem>>, vector<27x128xf32>,
    return
  }
  func.func @transform_0(%arg0: i32) -> (i32, i32) {
    %c0_i32 = arith.constant 0 : i32
    %c0_i32_0 = arith.constant 0 : i32
    return %c0_i32, %arg0 : i32, i32
  }
  func.func @transform_1(%arg0: i32) -> (i32, i32) {
    %c0_i32 = arith.constant 0 : i32
    %c0_i32_0 = arith.constant 0 : i32
    return %c0_i32, %arg0 : i32, i32
  }
}

</mosaic_0001>

<llo_original>
// kernel: tpu_custom_call.1
$region0: #{tpu_custom_call.1}
  #allocation0 [shape = 'u32[]', space=smem, size = 0x4, offset = 0x4, fixed_abs, tag = 'smem constant byte address 0x4 - core index']
  #allocation1 [shape = 'u32[144,128]{1,0:T(1,128)}', space=vmem, size = 0x12000, scoped, tag = 'internal scratch']
  %s0 = inlined_call_operand.hbm [shape: f32[3,16], index: 0, kind: input, shape index: {}]
  %s1 = inlined_call_operand.hbm [shape: f32[16,27], index: 1, kind: output, shape index: {}]
  %s2 = sld [smem:[#allocation0]]
  $region18: #{tpu_custom_call.1} parent=0
    _
  %s4 = ssub.s32 1, %s2
  %s5 = scalar_select 0, %s4, %s2
  $region1: #{tpu_custom_call.1} parent=0
    #allocation2 [shape = 'u8[2048]{0}', space=vmem, size = 0x800, scoped, tag = 'input window, operand 0, single buffered']
    #allocation3 [shape = 's32[1]{0}', space=sflag, size = 0x4, scoped, tag = 'scoped memory for tpu_custom_call.1']
    #allocation4 [shape = 's32[1]{0}', space=sflag, size = 0x4, scoped, tag = 'scoped memory for tpu_custom_call.1']
    #allocation5 [shape = 'u8[65536]{0}', space=vmem, size = 0x10000, scoped, tag = 'output window, operand 0, single buffered']
    %6 = vsyncpa [#allocation3], 0
    %7 = vsyncpa [#allocation4], 0
    // Predicated region
    $region2: #{tpu_custom_call.1} parent=1 // pred_check
      _
    $region3: #{tpu_custom_call.1} parent=1 // pred_check_branch
      %9 = sbr.rel (0) target = $region5
    $region4: #{tpu_custom_call.1} parent=1 // pred_region
      %s11 = ssub.s32 64, 64
      %12 = vsyncadd [#allocation3], %s11
      %s14 = sshll.u32 [#allocation2], 4
      %s15 = int_to_ptr.vmem [resolvable:$true] %s14
      %17 = dma.hbm_to_vmem [thread:$0]  %s0, 64, %s15, [#allocation3]
    $region5: #{tpu_custom_call.1} parent=1 // pred_fallthru
      _
    // Predicated region
    $region6: #{tpu_custom_call.1} parent=1 // pred_check
      _
    $region7: #{tpu_custom_call.1} parent=1 // pred_check_branch
      %19 = sbr.rel (0) target = $region9
    $region8: #{tpu_custom_call.1} parent=1 // pred_region
      %20 = dma.done [#allocation3], 64
    $region9: #{tpu_custom_call.1} parent=1 // pred_fallthru
      _
    %v21 = vld [vmem:[#allocation2] sm:$0x7]
    %v22 = vmul.f32 %v21, 2.0
    %v23 = vmul.f32 %v21, 4.0
    %v24 = vmul.f32 %v21, 8.0
    %v26 = vrot.slane %v22, 5
    %v29 = vrot.slane %v23, 2
    %v32 = vrot.slane %v24, 7
    %vm34 = vcmask 1042432
    %v35 = vsel %vm34, %v21, %v26
    %vm36 = vcmask 1045504
    %v37 = vsel %vm36, %v35, %v29
    %vm38 = vcmask 1040384
    %v39 = vsel %vm38, %v29, %v32
    %v40 = vand.u32 2147483647, %v37
    %vm41 = vcmp.le.f32.partialorder %v40, 0.7853982
    %vm42 = vcmp.lt.s32.totalorder %v37, 0
    %v43 = vand.u32 %v37, 2139095040
    %v44 = vshrl.u32 %v43, 23
    %v45 = vsub.s32 %v44, 127
    %v46 = vand.u32 2147483647, %v37
    %v47 = vand.u32 %v46, 8388607
    %v48 = vor.u32 %v47, 8388608
    %v49 = vsub.s32 0, %v48
    %v50 = vadd.s32 %v45, 1
    %vm51 = vcmp.gt.s32.totalorder %v50, 0
    %v52 = vsel %vm51, %v50, 0
    %v53 = vshrl.u32 %v52, 5
    %v54 = vand.u32 %v52, 31
    %v55 = vsub.s32 32, %v54
    %v56 = vshrl.u32 683565275, %v55
    %v57 = vshll.u32 683565275, %v54
    %v58 = vshrl.u32 2475754826, %v55
    %v59 = vor.u32 %v57, %v58
    %v60 = vshll.u32 2475754826, %v54
    %v61 = vshrl.u32 2131351028, %v55
    %v62 = vor.u32 %v60, %v61
    %v63 = vshll.u32 2131351028, %v54
    %v64 = vshrl.u32 2102212464, %v55
    %v65 = vor.u32 %v63, %v64
    %v66 = vshll.u32 2102212464, %v54
    %v67 = vshrl.u32 920167782, %v55
    %v68 = vor.u32 %v66, %v67
    %v69 = vshll.u32 920167782, %v54
    %v70 = vshrl.u32 1326507024, %v55
    %v71 = vor.u32 %v69, %v70
    %vm72 = vcmp.lt.s32.totalorder %v53, 1
    %vm73 = vcmp.lt.s32.totalorder %v53, 2
    %vm74 = vcmp.lt.s32.totalorder %v53, 3
    %vm75 = vcmp.lt.s32.totalorder %v53, 4
    %v76 = vsel %vm72, %v56, %v59
    %v77 = vsel %vm75, %v65, 2102212464
    %v78 = vsel %vm74, %v62, %v77
    %v79 = vsel %vm73, %v76, %v78
    %v80 = vsel %vm72, %v59, %v62
    %v81 = vsel %vm75, %v68, 920167782
    %v82 = vsel %vm74, %v65, %v81
    %v83 = vsel %vm73, %v80, %v82
    %v84 = vsel %vm72, %v62, %v65
    %v85 = vsel %vm75, %v71, 1326507024
    %v86 = vsel %vm74, %v68, %v85
    %v87 = vsel %vm73, %v84, %v86
    %v88 = vshll.u32 %v48, 8
    %v89 = vmul.u32.u64.compose %v88, %v87
    %v90 = vextract.low.u32 %v89
    %v91 = vextract.high.u32 %v89
    %v92 = vmul.u32.u64.compose %v88, %v83
    %v93 = vextract.low.u32 %v92
    %v94 = vextract.high.u32 %v92
    %v95 = vmul.u32 %v88, %v79
    %v96 = vadd.s32 %v91, %v93
    %vm97 = vc.u32 %v91, %v93
    %v98 = vadd.s32 %v94, 1
    %v99 = vsel %vm97, %v98, %v94
    %v100 = vadd.s32 %v95, %v99
    %v101 = vadd.s32 %v100, 536870912
    %v102 = vshrl.u32 %v101, 30
    %v103 = vshll.u32 %v102, 30
    %v104 = vsub.s32 %v100, %v103
    %vm105 = vcmp.lt.s32.totalorder %v104, 0
    %v106 = vsub.s32 0, %v104
    %v107 = vsel %vm105, %v106, %v104
    %v108 = vclz %v107
    %v109 = vsub.s32 %v108, 2
    %vm110 = vcmp.gt.s32.totalorder 0, %v109
    %v111 = vsel %vm110, 0, %v109
    %v112 = vsub.s32 32, %v111
    %v113 = vshll.u32 %v104, %v111
    %v114 = vshrl.u32 %v96, %v112
    %v115 = vor.u32 %v113, %v114
    %v116 = vsub.s32 4294967266, %v111
    %v117 = vadd.s32 %v116, 127
    %v118 = vshll.u32 %v117, 23
    %v119 = vor.u32 4788187, %v118
    %v120 = vand.u32 2147483647, %v119
    %v122 = vcvt.s32.f32 %v115
    %v123 = vmul.f32 %v122, %v120
    %v124 = vxor.u32 %v123, 2147483648
    %v125 = vsel %vm42, %v124, %v123
    %v126 = vsub.s32 4, %v102
    %v127 = vsel %vm42, %v126, %v102
    %v128 = vsel %vm41, %v37, %v125
    %v129 = vsel %vm41, 0, %v127
    %v130 = vcosq.f32.pop %v128
    %v131 = vsinq.f32.pop %v128
    %vm132 = vweird.f32 %v37
    %v133 = vadd.s32 %v129, 3
    %v134 = vand.u32 %v133, 3
    %vm135 = vcmp.lt.s32.totalorder %v134, 2
    %vm136 = vcmp.eq.s32.totalorder %v134, 0
    %v137 = vxor.u32 %v131, 2147483648
    %v138 = vsel %vm136, %v130, %v137
    %vm139 = vcmp.eq.s32.totalorder %v134, 2
    %v140 = vxor.u32 %v130, 2147483648
    %v141 = vsel %vm139, %v140, %v131
    %v142 = vsel %vm135, %v138, %v141
    %v143 = vsel %vm132, nan, %v142
    %v144 = vand.u32 2147483647, %v39
    %vm145 = vcmp.le.f32.partialorder %v144, 0.7853982
    %vm146 = vcmp.lt.s32.totalorder %v39, 0
    %v147 = vand.u32 %v39, 2139095040
    %v148 = vshrl.u32 %v147, 23
    %v149 = vsub.s32 %v148, 127
    %v150 = vand.u32 2147483647, %v39
    %v151 = vand.u32 %v150, 8388607
    %v152 = vor.u32 %v151, 8388608
    %v153 = vsub.s32 0, %v152
    %v154 = vadd.s32 %v149, 1
    %vm155 = vcmp.gt.s32.totalorder %v154, 0
    %v156 = vsel %vm155, %v154, 0
    %v157 = vshrl.u32 %v156, 5
    %v158 = vand.u32 %v156, 31
    %v159 = vsub.s32 32, %v158
    %v160 = vshrl.u32 683565275, %v159
    %v161 = vshll.u32 683565275, %v158
    %v162 = vshrl.u32 2475754826, %v159
    %v163 = vor.u32 %v161, %v162
    %v164 = vshll.u32 2475754826, %v158
    %v165 = vshrl.u32 2131351028, %v159
    %v166 = vor.u32 %v164, %v165
    %v167 = vshll.u32 2131351028, %v158
    %v168 = vshrl.u32 2102212464, %v159
    %v169 = vor.u32 %v167, %v168
    %v170 = vshll.u32 2102212464, %v158
    %v171 = vshrl.u32 920167782, %v159
    %v172 = vor.u32 %v170, %v171
    %v173 = vshll.u32 920167782, %v158
    %v174 = vshrl.u32 1326507024, %v159
    %v175 = vor.u32 %v173, %v174
    %vm176 = vcmp.lt.s32.totalorder %v157, 1
    %vm177 = vcmp.lt.s32.totalorder %v157, 2
    %vm178 = vcmp.lt.s32.totalorder %v157, 3
    %vm179 = vcmp.lt.s32.totalorder %v157, 4
    %v180 = vsel %vm176, %v160, %v163
    %v181 = vsel %vm179, %v169, 2102212464
    %v182 = vsel %vm178, %v166, %v181
    %v183 = vsel %vm177, %v180, %v182
    %v184 = vsel %vm176, %v163, %v166
    %v185 = vsel %vm179, %v172, 920167782
    %v186 = vsel %vm178, %v169, %v185
    %v187 = vsel %vm177, %v184, %v186
    %v188 = vsel %vm176, %v166, %v169
    %v189 = vsel %vm179, %v175, 1326507024
    %v190 = vsel %vm178, %v172, %v189
    %v191 = vsel %vm177, %v188, %v190
    %v192 = vshll.u32 %v152, 8
    %v193 = vmul.u32.u64.compose %v192, %v191
    %v194 = vextract.low.u32 %v193
    %v195 = vextract.high.u32 %v193
    %v196 = vmul.u32.u64.compose %v192, %v187
    %v197 = vextract.low.u32 %v196
    %v198 = vextract.high.u32 %v196
    %v199 = vmul.u32 %v192, %v183
    %v200 = vadd.s32 %v195, %v197
    %vm201 = vc.u32 %v195, %v197
    %v202 = vadd.s32 %v198, 1
    %v203 = vsel %vm201, %v202, %v198
    %v204 = vadd.s32 %v199, %v203
    %v205 = vadd.s32 %v204, 536870912
    %v206 = vshrl.u32 %v205, 30
    %v207 = vshll.u32 %v206, 30
    %v208 = vsub.s32 %v204, %v207
    %vm209 = vcmp.lt.s32.totalorder %v208, 0
    %v210 = vsub.s32 0, %v208
    %v211 = vsel %vm209, %v210, %v208
    %v212 = vclz %v211
    %v213 = vsub.s32 %v212, 2
    %vm214 = vcmp.gt.s32.totalorder 0, %v213
    %v215 = vsel %vm214, 0, %v213
    %v216 = vsub.s32 32, %v215
    %v217 = vshll.u32 %v208, %v215
    %v218 = vshrl.u32 %v200, %v216
    %v219 = vor.u32 %v217, %v218
    %v220 = vsub.s32 4294967266, %v215
    %v221 = vadd.s32 %v220, 127
    %v222 = vshll.u32 %v221, 23
    %v223 = vor.u32 4788187, %v222
    %v224 = vand.u32 2147483647, %v223
    %v226 = vcvt.s32.f32 %v219
    %v227 = vmul.f32 %v226, %v224
    %v228 = vxor.u32 %v227, 2147483648
    %v229 = vsel %vm146, %v228, %v227
    %v230 = vsub.s32 4, %v206
    %v231 = vsel %vm146, %v230, %v206
    %v232 = vsel %vm145, %v39, %v229
    %v233 = vsel %vm145, 0, %v231
    %v234 = vcosq.f32.pop %v232
    %v235 = vsinq.f32.pop %v232
    %vm236 = vweird.f32 %v39
    %v237 = vadd.s32 %v233, 3
    %v238 = vand.u32 %v237, 3
    %vm239 = vcmp.lt.s32.totalorder %v238, 2
    %vm240 = vcmp.eq.s32.totalorder %v238, 0
    %v241 = vxor.u32 %v235, 2147483648
    %v242 = vsel %vm240, %v234, %v241
    %vm243 = vcmp.eq.s32.totalorder %v238, 2
    %v244 = vxor.u32 %v234, 2147483648
    %v245 = vsel %vm243, %v244, %v235
    %v246 = vsel %vm239, %v242, %v245
    %v247 = vsel %vm236, nan, %v246
    %v248 = vand.u32 2147483647, %v37
    %vm249 = vcmp.le.f32.partialorder %v248, 0.7853982
    %vm250 = vcmp.lt.s32.totalorder %v37, 0
    %v251 = vand.u32 %v37, 2139095040
    %v252 = vshrl.u32 %v251, 23
    %v253 = vsub.s32 %v252, 127
    %v254 = vand.u32 2147483647, %v37
    %v255 = vand.u32 %v254, 8388607
    %v256 = vor.u32 %v255, 8388608
    %v257 = vsub.s32 0, %v256
    %v258 = vadd.s32 %v253, 1
    %vm259 = vcmp.gt.s32.totalorder %v258, 0
    %v260 = vsel %vm259, %v258, 0
    %v261 = vshrl.u32 %v260, 5
    %v262 = vand.u32 %v260, 31
    %v263 = vsub.s32 32, %v262
    %v264 = vshrl.u32 683565275, %v263
    %v265 = vshll.u32 683565275, %v262
    %v266 = vshrl.u32 2475754826, %v263
    %v267 = vor.u32 %v265, %v266
    %v268 = vshll.u32 2475754826, %v262
    %v269 = vshrl.u32 2131351028, %v263
    %v270 = vor.u32 %v268, %v269
    %v271 = vshll.u32 2131351028, %v262
    %v272 = vshrl.u32 2102212464, %v263
    %v273 = vor.u32 %v271, %v272
    %v274 = vshll.u32 2102212464, %v262
    %v275 = vshrl.u32 920167782, %v263
    %v276 = vor.u32 %v274, %v275
    %v277 = vshll.u32 920167782, %v262
    %v278 = vshrl.u32 1326507024, %v263
    %v279 = vor.u32 %v277, %v278
    %vm280 = vcmp.lt.s32.totalorder %v261, 1
    %vm281 = vcmp.lt.s32.totalorder %v261, 2
    %vm282 = vcmp.lt.s32.totalorder %v261, 3
    %vm283 = vcmp.lt.s32.totalorder %v261, 4
    %v284 = vsel %vm280, %v264, %v267
    %v285 = vsel %vm283, %v273, 2102212464
    %v286 = vsel %vm282, %v270, %v285
    %v287 = vsel %vm281, %v284, %v286
    %v288 = vsel %vm280, %v267, %v270
    %v289 = vsel %vm283, %v276, 920167782
    %v290 = vsel %vm282, %v273, %v289
    %v291 = vsel %vm281, %v288, %v290
    %v292 = vsel %vm280, %v270, %v273
    %v293 = vsel %vm283, %v279, 1326507024
    %v294 = vsel %vm282, %v276, %v293
    %v295 = vsel %vm281, %v292, %v294
    %v296 = vshll.u32 %v256, 8
    %v297 = vmul.u32.u64.compose %v296, %v295
    %v298 = vextract.low.u32 %v297
    %v299 = vextract.high.u32 %v297
    %v300 = vmul.u32.u64.compose %v296, %v291
    %v301 = vextract.low.u32 %v300
    %v302 = vextract.high.u32 %v300
    %v303 = vmul.u32 %v296, %v287
    %v304 = vadd.s32 %v299, %v301
    %vm305 = vc.u32 %v299, %v301
    %v306 = vadd.s32 %v302, 1
    %v307 = vsel %vm305, %v306, %v302
    %v308 = vadd.s32 %v303, %v307
    %v309 = vadd.s32 %v308, 536870912
    %v310 = vshrl.u32 %v309, 30
    %v311 = vshll.u32 %v310, 30
    %v312 = vsub.s32 %v308, %v311
    %vm313 = vcmp.lt.s32.totalorder %v312, 0
    %v314 = vsub.s32 0, %v312
    %v315 = vsel %vm313, %v314, %v312
    %v316 = vclz %v315
    %v317 = vsub.s32 %v316, 2
    %vm318 = vcmp.gt.s32.totalorder 0, %v317
    %v319 = vsel %vm318, 0, %v317
    %v320 = vsub.s32 32, %v319
    %v321 = vshll.u32 %v312, %v319
    %v322 = vshrl.u32 %v304, %v320
    %v323 = vor.u32 %v321, %v322
    %v324 = vsub.s32 4294967266, %v319
    %v325 = vadd.s32 %v324, 127
    %v326 = vshll.u32 %v325, 23
    %v327 = vor.u32 4788187, %v326
    %v328 = vand.u32 2147483647, %v327
    %v330 = vcvt.s32.f32 %v323
    %v331 = vmul.f32 %v330, %v328
    %v332 = vxor.u32 %v331, 2147483648
    %v333 = vsel %vm250, %v332, %v331
    %v334 = vsub.s32 4, %v310
    %v335 = vsel %vm250, %v334, %v310
    %v336 = vsel %vm249, %v37, %v333
    %v337 = vsel %vm249, 0, %v335
    %v338 = vcosq.f32.pop %v336
    %v339 = vsinq.f32.pop %v336
    %vm340 = vweird.f32 %v37
    %v341 = vand.u32 %v337, 3
    %vm342 = vcmp.lt.s32.totalorder %v341, 2
    %vm343 = vcmp.eq.s32.totalorder %v341, 0
    %v344 = vxor.u32 %v339, 2147483648
    %v345 = vsel %vm343, %v338, %v344
    %vm346 = vcmp.eq.s32.totalorder %v341, 2
    %v347 = vxor.u32 %v338, 2147483648
    %v348 = vsel %vm346, %v347, %v339
    %v349 = vsel %vm342, %v345, %v348
    %v350 = vsel %vm340, nan, %v349
    %v351 = vand.u32 2147483647, %v39
    %vm352 = vcmp.le.f32.partialorder %v351, 0.7853982
    %vm353 = vcmp.lt.s32.totalorder %v39, 0
    %v354 = vand.u32 %v39, 2139095040
    %v355 = vshrl.u32 %v354, 23
    %v356 = vsub.s32 %v355, 127
    %v357 = vand.u32 2147483647, %v39
    %v358 = vand.u32 %v357, 8388607
    %v359 = vor.u32 %v358, 8388608
    %v360 = vsub.s32 0, %v359
    %v361 = vadd.s32 %v356, 1
    %vm362 = vcmp.gt.s32.totalorder %v361, 0
    %v363 = vsel %vm362, %v361, 0
    %v364 = vshrl.u32 %v363, 5
    %v365 = vand.u32 %v363, 31
    %v366 = vsub.s32 32, %v365
    %v367 = vshrl.u32 683565275, %v366
    %v368 = vshll.u32 683565275, %v365
    %v369 = vshrl.u32 2475754826, %v366
    %v370 = vor.u32 %v368, %v369
    %v371 = vshll.u32 2475754826, %v365
    %v372 = vshrl.u32 2131351028, %v366
    %v373 = vor.u32 %v371, %v372
    %v374 = vshll.u32 2131351028, %v365
    %v375 = vshrl.u32 2102212464, %v366
    %v376 = vor.u32 %v374, %v375
    %v377 = vshll.u32 2102212464, %v365
    %v378 = vshrl.u32 920167782, %v366
    %v379 = vor.u32 %v377, %v378
    %v380 = vshll.u32 920167782, %v365
    %v381 = vshrl.u32 1326507024, %v366
    %v382 = vor.u32 %v380, %v381
    %vm383 = vcmp.lt.s32.totalorder %v364, 1
    %vm384 = vcmp.lt.s32.totalorder %v364, 2
    %vm385 = vcmp.lt.s32.totalorder %v364, 3
    %vm386 = vcmp.lt.s32.totalorder %v364, 4
    %v387 = vsel %vm383, %v367, %v370
    %v388 = vsel %vm386, %v376, 2102212464
    %v389 = vsel %vm385, %v373, %v388
    %v390 = vsel %vm384, %v387, %v389
    %v391 = vsel %vm383, %v370, %v373
    %v392 = vsel %vm386, %v379, 920167782
    %v393 = vsel %vm385, %v376, %v392
    %v394 = vsel %vm384, %v391, %v393
    %v395 = vsel %vm383, %v373, %v376
    %v396 = vsel %vm386, %v382, 1326507024
    %v397 = vsel %vm385, %v379, %v396
    %v398 = vsel %vm384, %v395, %v397
    %v399 = vshll.u32 %v359, 8
    %v400 = vmul.u32.u64.compose %v399, %v398
    %v401 = vextract.low.u32 %v400
    %v402 = vextract.high.u32 %v400
    %v403 = vmul.u32.u64.compose %v399, %v394
    %v404 = vextract.low.u32 %v403
    %v405 = vextract.high.u32 %v403
    %v406 = vmul.u32 %v399, %v390
    %v407 = vadd.s32 %v402, %v404
    %vm408 = vc.u32 %v402, %v404
    %v409 = vadd.s32 %v405, 1
    %v410 = vsel %vm408, %v409, %v405
    %v411 = vadd.s32 %v406, %v410
    %v412 = vadd.s32 %v411, 536870912
    %v413 = vshrl.u32 %v412, 30
    %v414 = vshll.u32 %v413, 30
    %v415 = vsub.s32 %v411, %v414
    %vm416 = vcmp.lt.s32.totalorder %v415, 0
    %v417 = vsub.s32 0, %v415
    %v418 = vsel %vm416, %v417, %v415
    %v419 = vclz %v418
    %v420 = vsub.s32 %v419, 2
    %vm421 = vcmp.gt.s32.totalorder 0, %v420
    %v422 = vsel %vm421, 0, %v420
    %v423 = vsub.s32 32, %v422
    %v424 = vshll.u32 %v415, %v422
    %v425 = vshrl.u32 %v407, %v423
    %v426 = vor.u32 %v424, %v425
    %v427 = vsub.s32 4294967266, %v422
    %v428 = vadd.s32 %v427, 127
    %v429 = vshll.u32 %v428, 23
    %v430 = vor.u32 4788187, %v429
    %v431 = vand.u32 2147483647, %v430
    %v433 = vcvt.s32.f32 %v426
    %v434 = vmul.f32 %v433, %v431
    %v435 = vxor.u32 %v434, 2147483648
    %v436 = vsel %vm353, %v435, %v434
    %v437 = vsub.s32 4, %v413
    %v438 = vsel %vm353, %v437, %v413
    %v439 = vsel %vm352, %v39, %v436
    %v440 = vsel %vm352, 0, %v438
    %v441 = vcosq.f32.pop %v439
    %v442 = vsinq.f32.pop %v439
    %vm443 = vweird.f32 %v39
    %v444 = vand.u32 %v440, 3
    %vm445 = vcmp.lt.s32.totalorder %v444, 2
    %vm446 = vcmp.eq.s32.totalorder %v444, 0
    %v447 = vxor.u32 %v442, 2147483648
    %v448 = vsel %vm446, %v441, %v447
    %vm449 = vcmp.eq.s32.totalorder %v444, 2
    %v450 = vxor.u32 %v441, 2147483648
    %v451 = vsel %vm449, %v450, %v442
    %v452 = vsel %vm445, %v448, %v451
    %v453 = vsel %vm443, nan, %v452
    %v455 = vrot.slane %v143, 5
    %v458 = vrot.slane %v350, 2
    %v460 = vrot.slane %v143, 2
    %v462 = vrot.slane %v350, 7
    %v465 = vrot.slane %v143, 7
    %v466 = vrot.slane %v247, 7
    %v467 = vsel %vm38, %v465, %v466
    %vm471 = vcmask 1043456
    %v472 = vrot.slane %v350, 4
    %v473 = vrot.slane %v453, 4
    %v474 = vsel %vm471, %v472, %v473
    %v476 = vrot.slane %v247, 4
    %v478 = vrot.slane %v453, 1
    %v480 = vsel %vm34, %v21, %v455
    %v481 = vsel %vm36, %v480, %v458
    %v482 = vsel %vm38, %v458, %v460
    %v483 = vsel %vm471, %v482, %v462
    %vm484 = vcmask 1046528
    %v485 = vsel %vm484, %v483, %v465
    %vm486 = vcmask 1041408
    %v487 = vsel %vm486, %v467, %v474
    %vm488 = vcmask 1044480
    %v489 = vsel %vm488, %v487, %v476
    %v490 = vsel %vm34, %v478, 0.0
    %491 = vxpose.xlu0.b32.start [1/16] %v481, 128
    %492 = vxpose.xlu0.b32.cont [2/16] %v485, 128
    %493 = vxpose.xlu0.b32.cont [3/16] %v489, 128
    %494 = vxpose.xlu0.b32.cont [4/16] %v490, 128
    %495 = vxpose.xlu0.b32.cont [5/16] 0.0, 128
    %496 = vxpose.xlu0.b32.cont [6/16] 0.0, 128
    %497 = vxpose.xlu0.b32.cont [7/16] 0.0, 128
    %498 = vxpose.xlu0.b32.cont [8/16] 0.0, 128
    %499 = vxpose.xlu0.b32.cont [9/16] 0.0, 128
    %500 = vxpose.xlu0.b32.cont [10/16] 0.0, 128
    %501 = vxpose.xlu0.b32.cont [11/16] 0.0, 128
    %502 = vxpose.xlu0.b32.cont [12/16] 0.0, 128
    %503 = vxpose.xlu0.b32.cont [13/16] 0.0, 128
    %504 = vxpose.xlu0.b32.cont [14/16] 0.0, 128
    %505 = vxpose.xlu0.b32.cont [15/16] 0.0, 128
    %506 = vxpose.xlu0.b32.end [16/16] 0.0, 128
    %v507 = vpop.trf.xlu0
    %v508 = vpop.trf.xlu0
    %v509 = vpop.trf.xlu0
    %v510 = vpop.trf.xlu0
    %v511 = vpop.trf.xlu0
    %v512 = vpop.trf.xlu0
    %v513 = vpop.trf.xlu0
    %v514 = vpop.trf.xlu0
    %v515 = vpop.trf.xlu0
    %v516 = vpop.trf.xlu0
    %v517 = vpop.trf.xlu0
    %v518 = vpop.trf.xlu0
    %v519 = vpop.trf.xlu0
    %v520 = vpop.trf.xlu0
    %v521 = vpop.trf.xlu0
    %v522 = vpop.trf.xlu0
    %vm523 = vcmask 220160
    %524 = vst.msk [vmem:[#allocation5] sm:$0xff] %vm523, %v507
    %525 = vst.msk [vmem:[#allocation5 + $0x8] sm:$0xff] %vm523, %v508
    %526 = vst.msk [vmem:[#allocation5 + $0x10] sm:$0xff] %vm523, %v509
    %527 = vst.msk [vmem:[#allocation5 + $0x18] sm:$0xff] %vm523, %v510
    %528 = vst.msk [vmem:[#allocation5 + $0x20] sm:$0xff] %vm523, %v511
    %529 = vst.msk [vmem:[#allocation5 + $0x28] sm:$0xff] %vm523, %v512
    %530 = vst.msk [vmem:[#allocation5 + $0x30] sm:$0xff] %vm523, %v513
    %531 = vst.msk [vmem:[#allocation5 + $0x38] sm:$0xff] %vm523, %v514
    %532 = vst.msk [vmem:[#allocation5 + $0x40] sm:$0xff] %vm523, %v515
    %533 = vst.msk [vmem:[#allocation5 + $0x48] sm:$0xff] %vm523, %v516
    %534 = vst.msk [vmem:[#allocation5 + $0x50] sm:$0xff] %vm523, %v517
    %535 = vst.msk [vmem:[#allocation5 + $0x58] sm:$0xff] %vm523, %v518
    %536 = vst.msk [vmem:[#allocation5 + $0x60] sm:$0xff] %vm523, %v519
    %537 = vst.msk [vmem:[#allocation5 + $0x68] sm:$0xff] %vm523, %v520
    %538 = vst.msk [vmem:[#allocation5 + $0x70] sm:$0xff] %vm523, %v521
    %539 = vst.msk [vmem:[#allocation5 + $0x78] sm:$0xff] %vm523, %v522
    // Predicated region
    $region10: #{tpu_custom_call.1} parent=1 // pred_check
      _
    $region11: #{tpu_custom_call.1} parent=1 // pred_check_branch
      %541 = sbr.rel (0) target = $region13
    $region12: #{tpu_custom_call.1} parent=1 // pred_region
      %s543 = ssub.s32 2048, 256
      %544 = vsyncadd [#allocation4], %s543
      %s545 = sshll.u32 [#allocation5], 4
      %s546 = int_to_ptr.vmem [resolvable:$true] %s545
      %551 = dma.vmem_to_hbm [thread:$0]  %s546, 256, %s1, [#allocation4], 128, 128, 8
    $region13: #{tpu_custom_call.1} parent=1 // pred_fallthru
      _
    // Predicated region
    $region14: #{tpu_custom_call.1} parent=1 // pred_check
      _
    $region15: #{tpu_custom_call.1} parent=1 // pred_check_branch
      %553 = sbr.rel (0) target = $region17
    $region16: #{tpu_custom_call.1} parent=1 // pred_region
      %554 = dma.done [#allocation4], 2048
    $region17: #{tpu_custom_call.1} parent=1 // pred_fallthru
      _
    %555 = vsyncpa [#allocation3], 1
    %556 = vsyncpa [#allocation4], 1

// kernel: tpu_custom_call.1
$region0: #{tpu_custom_call.1}
  #allocation0 [shape = 'u32[]', space=smem, size = 0x4, offset = 0x4, fixed_abs, tag = 'smem constant byte address 0x4 - core index']
  #allocation1 [shape = 'u32[144,128]{1,0:T(1,128)}', space=vmem, size = 0x12000, scoped, tag = 'internal scratch']
  %s0 = inlined_call_operand.hbm [shape: f32[3,16], index: 0, kind: input, shape index: {}]
  %s1 = inlined_call_operand.vmem [shape: f32[27,16], index: 1, kind: output, shape index: {}]
  %s2 = sld [smem:[#allocation0]]
  $region18: #{tpu_custom_call.1} parent=0
    _
  %s4 = ssub.s32 1, %s2
  %s5 = scalar_select 0, %s4, %s2
  $region1: #{tpu_custom_call.1} parent=0
    #allocation2 [shape = 'u8[2048]{0}', space=vmem, size = 0x800, scoped, tag = 'input window, operand 0, single buffered']
    #allocation3 [shape = 's32[1]{0}', space=sflag, size = 0x4, scoped, tag = 'scoped memory for tpu_custom_call.1']
    %6 = vsyncpa [#allocation3], 0
    // Predicated region
    $region2: #{tpu_custom_call.1} parent=1 // pred_check
      _
    $region3: #{tpu_custom_call.1} parent=1 // pred_check_branch
      %8 = sbr.rel (0) target = $region5
    $region4: #{tpu_custom_call.1} parent=1 // pred_region
      %s10 = ssub.s32 64, 64
      %11 = vsyncadd [#allocation3], %s10
      %s13 = sshll.u32 [#allocation2], 4
      %s14 = int_to_ptr.vmem [resolvable:$true] %s13
      %16 = dma.hbm_to_vmem [thread:$0]  %s0, 64, %s14, [#allocation3]
    $region5: #{tpu_custom_call.1} parent=1 // pred_fallthru
      _
    // Predicated region
    $region6: #{tpu_custom_call.1} parent=1 // pred_check
      _
    $region7: #{tpu_custom_call.1} parent=1 // pred_check_branch
      %18 = sbr.rel (0) target = $region9
    $region8: #{tpu_custom_call.1} parent=1 // pred_region
      %19 = dma.done [#allocation3], 64
    $region9: #{tpu_custom_call.1} parent=1 // pred_fallthru
      _
    %v20 = vld [vmem:[#allocation2] sm:$0x7]
    %v21 = vmul.f32 %v20, 2.0
    %v22 = vmul.f32 %v20, 4.0
    %v23 = vmul.f32 %v20, 8.0
    %v25 = vrot.slane %v21, 5
    %v28 = vrot.slane %v22, 2
    %v31 = vrot.slane %v23, 7
    %vm33 = vcmask 1042432
    %v34 = vsel %vm33, %v20, %v25
    %vm35 = vcmask 1045504
    %v36 = vsel %vm35, %v34, %v28
    %vm37 = vcmask 1040384
    %v38 = vsel %vm37, %v28, %v31
    %v39 = vand.u32 2147483647, %v36
    %vm40 = vcmp.le.f32.partialorder %v39, 0.7853982
    %vm41 = vcmp.lt.s32.totalorder %v36, 0
    %v42 = vand.u32 %v36, 2139095040
    %v43 = vshrl.u32 %v42, 23
    %v44 = vsub.s32 %v43, 127
    %v45 = vand.u32 2147483647, %v36
    %v46 = vand.u32 %v45, 8388607
    %v47 = vor.u32 %v46, 8388608
    %v48 = vsub.s32 0, %v47
    %v49 = vadd.s32 %v44, 1
    %vm50 = vcmp.gt.s32.totalorder %v49, 0
    %v51 = vsel %vm50, %v49, 0
    %v52 = vshrl.u32 %v51, 5
    %v53 = vand.u32 %v51, 31
    %v54 = vsub.s32 32, %v53
    %v55 = vshrl.u32 683565275, %v54
    %v56 = vshll.u32 683565275, %v53
    %v57 = vshrl.u32 2475754826, %v54
    %v58 = vor.u32 %v56, %v57
    %v59 = vshll.u32 2475754826, %v53
    %v60 = vshrl.u32 2131351028, %v54
    %v61 = vor.u32 %v59, %v60
    %v62 = vshll.u32 2131351028, %v53
    %v63 = vshrl.u32 2102212464, %v54
    %v64 = vor.u32 %v62, %v63
    %v65 = vshll.u32 2102212464, %v53
    %v66 = vshrl.u32 920167782, %v54
    %v67 = vor.u32 %v65, %v66
    %v68 = vshll.u32 920167782, %v53
    %v69 = vshrl.u32 1326507024, %v54
    %v70 = vor.u32 %v68, %v69
    %vm71 = vcmp.lt.s32.totalorder %v52, 1
    %vm72 = vcmp.lt.s32.totalorder %v52, 2
    %vm73 = vcmp.lt.s32.totalorder %v52, 3
    %vm74 = vcmp.lt.s32.totalorder %v52, 4
    %v75 = vsel %vm71, %v55, %v58
    %v76 = vsel %vm74, %v64, 2102212464
    %v77 = vsel %vm73, %v61, %v76
    %v78 = vsel %vm72, %v75, %v77
    %v79 = vsel %vm71, %v58, %v61
    %v80 = vsel %vm74, %v67, 920167782
    %v81 = vsel %vm73, %v64, %v80
    %v82 = vsel %vm72, %v79, %v81
    %v83 = vsel %vm71, %v61, %v64
    %v84 = vsel %vm74, %v70, 1326507024
    %v85 = vsel %vm73, %v67, %v84
    %v86 = vsel %vm72, %v83, %v85
    %v87 = vshll.u32 %v47, 8
    %v88 = vmul.u32.u64.compose %v87, %v86
    %v89 = vextract.low.u32 %v88
    %v90 = vextract.high.u32 %v88
    %v91 = vmul.u32.u64.compose %v87, %v82
    %v92 = vextract.low.u32 %v91
    %v93 = vextract.high.u32 %v91
    %v94 = vmul.u32 %v87, %v78
    %v95 = vadd.s32 %v90, %v92
    %vm96 = vc.u32 %v90, %v92
    %v97 = vadd.s32 %v93, 1
    %v98 = vsel %vm96, %v97, %v93
    %v99 = vadd.s32 %v94, %v98
    %v100 = vadd.s32 %v99, 536870912
    %v101 = vshrl.u32 %v100, 30
    %v102 = vshll.u32 %v101, 30
    %v103 = vsub.s32 %v99, %v102
    %vm104 = vcmp.lt.s32.totalorder %v103, 0
    %v105 = vsub.s32 0, %v103
    %v106 = vsel %vm104, %v105, %v103
    %v107 = vclz %v106
    %v108 = vsub.s32 %v107, 2
    %vm109 = vcmp.gt.s32.totalorder 0, %v108
    %v110 = vsel %vm109, 0, %v108
    %v111 = vsub.s32 32, %v110
    %v112 = vshll.u32 %v103, %v110
    %v113 = vshrl.u32 %v95, %v111
    %v114 = vor.u32 %v112, %v113
    %v115 = vsub.s32 4294967266, %v110
    %v116 = vadd.s32 %v115, 127
    %v117 = vshll.u32 %v116, 23
    %v118 = vor.u32 4788187, %v117
    %v119 = vand.u32 2147483647, %v118
    %v121 = vcvt.s32.f32 %v114
    %v122 = vmul.f32 %v121, %v119
    %v123 = vxor.u32 %v122, 2147483648
    %v124 = vsel %vm41, %v123, %v122
    %v125 = vsub.s32 4, %v101
    %v126 = vsel %vm41, %v125, %v101
    %v127 = vsel %vm40, %v36, %v124
    %v128 = vsel %vm40, 0, %v126
    %v129 = vcosq.f32.pop %v127
    %v130 = vsinq.f32.pop %v127
    %vm131 = vweird.f32 %v36
    %v132 = vadd.s32 %v128, 3
    %v133 = vand.u32 %v132, 3
    %vm134 = vcmp.lt.s32.totalorder %v133, 2
    %vm135 = vcmp.eq.s32.totalorder %v133, 0
    %v136 = vxor.u32 %v130, 2147483648
    %v137 = vsel %vm135, %v129, %v136
    %vm138 = vcmp.eq.s32.totalorder %v133, 2
    %v139 = vxor.u32 %v129, 2147483648
    %v140 = vsel %vm138, %v139, %v130
    %v141 = vsel %vm134, %v137, %v140
    %v142 = vsel %vm131, nan, %v141
    %v143 = vand.u32 2147483647, %v38
    %vm144 = vcmp.le.f32.partialorder %v143, 0.7853982
    %vm145 = vcmp.lt.s32.totalorder %v38, 0
    %v146 = vand.u32 %v38, 2139095040
    %v147 = vshrl.u32 %v146, 23
    %v148 = vsub.s32 %v147, 127
    %v149 = vand.u32 2147483647, %v38
    %v150 = vand.u32 %v149, 8388607
    %v151 = vor.u32 %v150, 8388608
    %v152 = vsub.s32 0, %v151
    %v153 = vadd.s32 %v148, 1
    %vm154 = vcmp.gt.s32.totalorder %v153, 0
    %v155 = vsel %vm154, %v153, 0
    %v156 = vshrl.u32 %v155, 5
    %v157 = vand.u32 %v155, 31
    %v158 = vsub.s32 32, %v157
    %v159 = vshrl.u32 683565275, %v158
    %v160 = vshll.u32 683565275, %v157
    %v161 = vshrl.u32 2475754826, %v158
    %v162 = vor.u32 %v160, %v161
    %v163 = vshll.u32 2475754826, %v157
    %v164 = vshrl.u32 2131351028, %v158
    %v165 = vor.u32 %v163, %v164
    %v166 = vshll.u32 2131351028, %v157
    %v167 = vshrl.u32 2102212464, %v158
    %v168 = vor.u32 %v166, %v167
    %v169 = vshll.u32 2102212464, %v157
    %v170 = vshrl.u32 920167782, %v158
    %v171 = vor.u32 %v169, %v170
    %v172 = vshll.u32 920167782, %v157
    %v173 = vshrl.u32 1326507024, %v158
    %v174 = vor.u32 %v172, %v173
    %vm175 = vcmp.lt.s32.totalorder %v156, 1
    %vm176 = vcmp.lt.s32.totalorder %v156, 2
    %vm177 = vcmp.lt.s32.totalorder %v156, 3
    %vm178 = vcmp.lt.s32.totalorder %v156, 4
    %v179 = vsel %vm175, %v159, %v162
    %v180 = vsel %vm178, %v168, 2102212464
    %v181 = vsel %vm177, %v165, %v180
    %v182 = vsel %vm176, %v179, %v181
    %v183 = vsel %vm175, %v162, %v165
    %v184 = vsel %vm178, %v171, 920167782
    %v185 = vsel %vm177, %v168, %v184
    %v186 = vsel %vm176, %v183, %v185
    %v187 = vsel %vm175, %v165, %v168
    %v188 = vsel %vm178, %v174, 1326507024
    %v189 = vsel %vm177, %v171, %v188
    %v190 = vsel %vm176, %v187, %v189
    %v191 = vshll.u32 %v151, 8
    %v192 = vmul.u32.u64.compose %v191, %v190
    %v193 = vextract.low.u32 %v192
    %v194 = vextract.high.u32 %v192
    %v195 = vmul.u32.u64.compose %v191, %v186
    %v196 = vextract.low.u32 %v195
    %v197 = vextract.high.u32 %v195
    %v198 = vmul.u32 %v191, %v182
    %v199 = vadd.s32 %v194, %v196
    %vm200 = vc.u32 %v194, %v196
    %v201 = vadd.s32 %v197, 1
    %v202 = vsel %vm200, %v201, %v197
    %v203 = vadd.s32 %v198, %v202
    %v204 = vadd.s32 %v203, 536870912
    %v205 = vshrl.u32 %v204, 30
    %v206 = vshll.u32 %v205, 30
    %v207 = vsub.s32 %v203, %v206
    %vm208 = vcmp.lt.s32.totalorder %v207, 0
    %v209 = vsub.s32 0, %v207
    %v210 = vsel %vm208, %v209, %v207
    %v211 = vclz %v210
    %v212 = vsub.s32 %v211, 2
    %vm213 = vcmp.gt.s32.totalorder 0, %v212
    %v214 = vsel %vm213, 0, %v212
    %v215 = vsub.s32 32, %v214
    %v216 = vshll.u32 %v207, %v214
    %v217 = vshrl.u32 %v199, %v215
    %v218 = vor.u32 %v216, %v217
    %v219 = vsub.s32 4294967266, %v214
    %v220 = vadd.s32 %v219, 127
    %v221 = vshll.u32 %v220, 23
    %v222 = vor.u32 4788187, %v221
    %v223 = vand.u32 2147483647, %v222
    %v225 = vcvt.s32.f32 %v218
    %v226 = vmul.f32 %v225, %v223
    %v227 = vxor.u32 %v226, 2147483648
    %v228 = vsel %vm145, %v227, %v226
    %v229 = vsub.s32 4, %v205
    %v230 = vsel %vm145, %v229, %v205
    %v231 = vsel %vm144, %v38, %v228
    %v232 = vsel %vm144, 0, %v230
    %v233 = vcosq.f32.pop %v231
    %v234 = vsinq.f32.pop %v231
    %vm235 = vweird.f32 %v38
    %v236 = vadd.s32 %v232, 3
    %v237 = vand.u32 %v236, 3
    %vm238 = vcmp.lt.s32.totalorder %v237, 2
    %vm239 = vcmp.eq.s32.totalorder %v237, 0
    %v240 = vxor.u32 %v234, 2147483648
    %v241 = vsel %vm239, %v233, %v240
    %vm242 = vcmp.eq.s32.totalorder %v237, 2
    %v243 = vxor.u32 %v233, 2147483648
    %v244 = vsel %vm242, %v243, %v234
    %v245 = vsel %vm238, %v241, %v244
    %v246 = vsel %vm235, nan, %v245
    %v247 = vand.u32 2147483647, %v36
    %vm248 = vcmp.le.f32.partialorder %v247, 0.7853982
    %vm249 = vcmp.lt.s32.totalorder %v36, 0
    %v250 = vand.u32 %v36, 2139095040
    %v251 = vshrl.u32 %v250, 23
    %v252 = vsub.s32 %v251, 127
    %v253 = vand.u32 2147483647, %v36
    %v254 = vand.u32 %v253, 8388607
    %v255 = vor.u32 %v254, 8388608
    %v256 = vsub.s32 0, %v255
    %v257 = vadd.s32 %v252, 1
    %vm258 = vcmp.gt.s32.totalorder %v257, 0
    %v259 = vsel %vm258, %v257, 0
    %v260 = vshrl.u32 %v259, 5
    %v261 = vand.u32 %v259, 31
    %v262 = vsub.s32 32, %v261
    %v263 = vshrl.u32 683565275, %v262
    %v264 = vshll.u32 683565275, %v261
    %v265 = vshrl.u32 2475754826, %v262
    %v266 = vor.u32 %v264, %v265
    %v267 = vshll.u32 2475754826, %v261
    %v268 = vshrl.u32 2131351028, %v262
    %v269 = vor.u32 %v267, %v268
    %v270 = vshll.u32 2131351028, %v261
    %v271 = vshrl.u32 2102212464, %v262
    %v272 = vor.u32 %v270, %v271
    %v273 = vshll.u32 2102212464, %v261
    %v274 = vshrl.u32 920167782, %v262
    %v275 = vor.u32 %v273, %v274
    %v276 = vshll.u32 920167782, %v261
    %v277 = vshrl.u32 1326507024, %v262
    %v278 = vor.u32 %v276, %v277
    %vm279 = vcmp.lt.s32.totalorder %v260, 1
    %vm280 = vcmp.lt.s32.totalorder %v260, 2
    %vm281 = vcmp.lt.s32.totalorder %v260, 3
    %vm282 = vcmp.lt.s32.totalorder %v260, 4
    %v283 = vsel %vm279, %v263, %v266
    %v284 = vsel %vm282, %v272, 2102212464
    %v285 = vsel %vm281, %v269, %v284
    %v286 = vsel %vm280, %v283, %v285
    %v287 = vsel %vm279, %v266, %v269
    %v288 = vsel %vm282, %v275, 920167782
    %v289 = vsel %vm281, %v272, %v288
    %v290 = vsel %vm280, %v287, %v289
    %v291 = vsel %vm279, %v269, %v272
    %v292 = vsel %vm282, %v278, 1326507024
    %v293 = vsel %vm281, %v275, %v292
    %v294 = vsel %vm280, %v291, %v293
    %v295 = vshll.u32 %v255, 8
    %v296 = vmul.u32.u64.compose %v295, %v294
    %v297 = vextract.low.u32 %v296
    %v298 = vextract.high.u32 %v296
    %v299 = vmul.u32.u64.compose %v295, %v290
    %v300 = vextract.low.u32 %v299
    %v301 = vextract.high.u32 %v299
    %v302 = vmul.u32 %v295, %v286
    %v303 = vadd.s32 %v298, %v300
    %vm304 = vc.u32 %v298, %v300
    %v305 = vadd.s32 %v301, 1
    %v306 = vsel %vm304, %v305, %v301
    %v307 = vadd.s32 %v302, %v306
    %v308 = vadd.s32 %v307, 536870912
    %v309 = vshrl.u32 %v308, 30
    %v310 = vshll.u32 %v309, 30
    %v311 = vsub.s32 %v307, %v310
    %vm312 = vcmp.lt.s32.totalorder %v311, 0
    %v313 = vsub.s32 0, %v311
    %v314 = vsel %vm312, %v313, %v311
    %v315 = vclz %v314
    %v316 = vsub.s32 %v315, 2
    %vm317 = vcmp.gt.s32.totalorder 0, %v316
    %v318 = vsel %vm317, 0, %v316
    %v319 = vsub.s32 32, %v318
    %v320 = vshll.u32 %v311, %v318
    %v321 = vshrl.u32 %v303, %v319
    %v322 = vor.u32 %v320, %v321
    %v323 = vsub.s32 4294967266, %v318
    %v324 = vadd.s32 %v323, 127
    %v325 = vshll.u32 %v324, 23
    %v326 = vor.u32 4788187, %v325
    %v327 = vand.u32 2147483647, %v326
    %v329 = vcvt.s32.f32 %v322
    %v330 = vmul.f32 %v329, %v327
    %v331 = vxor.u32 %v330, 2147483648
    %v332 = vsel %vm249, %v331, %v330
    %v333 = vsub.s32 4, %v309
    %v334 = vsel %vm249, %v333, %v309
    %v335 = vsel %vm248, %v36, %v332
    %v336 = vsel %vm248, 0, %v334
    %v337 = vcosq.f32.pop %v335
    %v338 = vsinq.f32.pop %v335
    %vm339 = vweird.f32 %v36
    %v340 = vand.u32 %v336, 3
    %vm341 = vcmp.lt.s32.totalorder %v340, 2
    %vm342 = vcmp.eq.s32.totalorder %v340, 0
    %v343 = vxor.u32 %v338, 2147483648
    %v344 = vsel %vm342, %v337, %v343
    %vm345 = vcmp.eq.s32.totalorder %v340, 2
    %v346 = vxor.u32 %v337, 2147483648
    %v347 = vsel %vm345, %v346, %v338
    %v348 = vsel %vm341, %v344, %v347
    %v349 = vsel %vm339, nan, %v348
    %v350 = vand.u32 2147483647, %v38
    %vm351 = vcmp.le.f32.partialorder %v350, 0.7853982
    %vm352 = vcmp.lt.s32.totalorder %v38, 0
    %v353 = vand.u32 %v38, 2139095040
    %v354 = vshrl.u32 %v353, 23
    %v355 = vsub.s32 %v354, 127
    %v356 = vand.u32 2147483647, %v38
    %v357 = vand.u32 %v356, 8388607
    %v358 = vor.u32 %v357, 8388608
    %v359 = vsub.s32 0, %v358
    %v360 = vadd.s32 %v355, 1
    %vm361 = vcmp.gt.s32.totalorder %v360, 0
    %v362 = vsel %vm361, %v360, 0
    %v363 = vshrl.u32 %v362, 5
    %v364 = vand.u32 %v362, 31
    %v365 = vsub.s32 32, %v364
    %v366 = vshrl.u32 683565275, %v365
    %v367 = vshll.u32 683565275, %v364
    %v368 = vshrl.u32 2475754826, %v365
    %v369 = vor.u32 %v367, %v368
    %v370 = vshll.u32 2475754826, %v364
    %v371 = vshrl.u32 2131351028, %v365
    %v372 = vor.u32 %v370, %v371
    %v373 = vshll.u32 2131351028, %v364
    %v374 = vshrl.u32 2102212464, %v365
    %v375 = vor.u32 %v373, %v374
    %v376 = vshll.u32 2102212464, %v364
    %v377 = vshrl.u32 920167782, %v365
    %v378 = vor.u32 %v376, %v377
    %v379 = vshll.u32 920167782, %v364
    %v380 = vshrl.u32 1326507024, %v365
    %v381 = vor.u32 %v379, %v380
    %vm382 = vcmp.lt.s32.totalorder %v363, 1
    %vm383 = vcmp.lt.s32.totalorder %v363, 2
    %vm384 = vcmp.lt.s32.totalorder %v363, 3
    %vm385 = vcmp.lt.s32.totalorder %v363, 4
    %v386 = vsel %vm382, %v366, %v369
    %v387 = vsel %vm385, %v375, 2102212464
    %v388 = vsel %vm384, %v372, %v387
    %v389 = vsel %vm383, %v386, %v388
    %v390 = vsel %vm382, %v369, %v372
    %v391 = vsel %vm385, %v378, 920167782
    %v392 = vsel %vm384, %v375, %v391
    %v393 = vsel %vm383, %v390, %v392
    %v394 = vsel %vm382, %v372, %v375
    %v395 = vsel %vm385, %v381, 1326507024
    %v396 = vsel %vm384, %v378, %v395
    %v397 = vsel %vm383, %v394, %v396
    %v398 = vshll.u32 %v358, 8
    %v399 = vmul.u32.u64.compose %v398, %v397
    %v400 = vextract.low.u32 %v399
    %v401 = vextract.high.u32 %v399
    %v402 = vmul.u32.u64.compose %v398, %v393
    %v403 = vextract.low.u32 %v402
    %v404 = vextract.high.u32 %v402
    %v405 = vmul.u32 %v398, %v389
    %v406 = vadd.s32 %v401, %v403
    %vm407 = vc.u32 %v401, %v403
    %v408 = vadd.s32 %v404, 1
    %v409 = vsel %vm407, %v408, %v404
    %v410 = vadd.s32 %v405, %v409
    %v411 = vadd.s32 %v410, 536870912
    %v412 = vshrl.u32 %v411, 30
    %v413 = vshll.u32 %v412, 30
    %v414 = vsub.s32 %v410, %v413
    %vm415 = vcmp.lt.s32.totalorder %v414, 0
    %v416 = vsub.s32 0, %v414
    %v417 = vsel %vm415, %v416, %v414
    %v418 = vclz %v417
    %v419 = vsub.s32 %v418, 2
    %vm420 = vcmp.gt.s32.totalorder 0, %v419
    %v421 = vsel %vm420, 0, %v419
    %v422 = vsub.s32 32, %v421
    %v423 = vshll.u32 %v414, %v421
    %v424 = vshrl.u32 %v406, %v422
    %v425 = vor.u32 %v423, %v424
    %v426 = vsub.s32 4294967266, %v421
    %v427 = vadd.s32 %v426, 127
    %v428 = vshll.u32 %v427, 23
    %v429 = vor.u32 4788187, %v428
    %v430 = vand.u32 2147483647, %v429
    %v432 = vcvt.s32.f32 %v425
    %v433 = vmul.f32 %v432, %v430
    %v434 = vxor.u32 %v433, 2147483648
    %v435 = vsel %vm352, %v434, %v433
    %v436 = vsub.s32 4, %v412
    %v437 = vsel %vm352, %v436, %v412
    %v438 = vsel %vm351, %v38, %v435
    %v439 = vsel %vm351, 0, %v437
    %v440 = vcosq.f32.pop %v438
    %v441 = vsinq.f32.pop %v438
    %vm442 = vweird.f32 %v38
    %v443 = vand.u32 %v439, 3
    %vm444 = vcmp.lt.s32.totalorder %v443, 2
    %vm445 = vcmp.eq.s32.totalorder %v443, 0
    %v446 = vxor.u32 %v441, 2147483648
    %v447 = vsel %vm445, %v440, %v446
    %vm448 = vcmp.eq.s32.totalorder %v443, 2
    %v449 = vxor.u32 %v440, 2147483648
    %v450 = vsel %vm448, %v449, %v441
    %v451 = vsel %vm444, %v447, %v450
    %v452 = vsel %vm442, nan, %v451
    %v454 = vrot.slane %v142, 5
    %v457 = vrot.slane %v349, 2
    %v459 = vrot.slane %v142, 2
    %v461 = vrot.slane %v349, 7
    %v464 = vrot.slane %v142, 7
    %v465 = vrot.slane %v246, 7
    %v466 = vsel %vm37, %v464, %v465
    %vm470 = vcmask 1043456
    %v471 = vrot.slane %v349, 4
    %v472 = vrot.slane %v452, 4
    %v473 = vsel %vm470, %v471, %v472
    %v475 = vrot.slane %v246, 4
    %v477 = vrot.slane %v452, 1
    %v479 = vsel %vm33, %v20, %v454
    %v480 = vsel %vm35, %v479, %v457
    %v481 = vsel %vm37, %v457, %v459
    %v482 = vsel %vm470, %v481, %v461
    %vm483 = vcmask 1046528
    %v484 = vsel %vm483, %v482, %v464
    %vm485 = vcmask 1041408
    %v486 = vsel %vm485, %v466, %v473
    %vm487 = vcmask 1044480
    %v488 = vsel %vm487, %v486, %v475
    %489 = vst [vmem:[%s1] sm:$0xff] %v480
    %490 = vst [vmem:[%s1 + $0x8] sm:$0xff] %v484
    %491 = vst [vmem:[%s1 + $0x10] sm:$0xff] %v488
    %492 = vst [vmem:[%s1 + $0x18] sm:$0x7] %v477
    // Predicated region
    $region10: #{tpu_custom_call.1} parent=1 // pred_check
      _
    $region11: #{tpu_custom_call.1} parent=1 // pred_check_branch
      %494 = sbr.rel (0) target = $region13
    $region12: #{tpu_custom_call.1} parent=1 // pred_region
      _
    $region13: #{tpu_custom_call.1} parent=1 // pred_fallthru
      _
    // Predicated region
    $region14: #{tpu_custom_call.1} parent=1 // pred_check
      _
    $region15: #{tpu_custom_call.1} parent=1 // pred_check_branch
      %496 = sbr.rel (0) target = $region17
    $region16: #{tpu_custom_call.1} parent=1 // pred_region
      _
    $region17: #{tpu_custom_call.1} parent=1 // pred_fallthru
      _
    %497 = vsyncpa [#allocation3], 1

</llo_original>
